<compile_context>
chip_gen: v6e
topology: v6e:2x2x1
jax: 0.10.0
libtpu: 0.0.40
codegen_flags: <defaults>
</compile_context>

<pallas_src>
import functools

import jax
import jax.numpy as jnp
from jax.experimental import pallas as pl
from jax.experimental.pallas import tpu as pltpu


def _round_up(x: int, m: int) -> int:
    return ((x + m - 1) // m) * m


def _global_pool_rows_kernel(x_ref, o_ref, *, pool_type: str, inv_hw: float):
    # x_ref block: (TILE_R, HW)   -- rows = (n, c) pairs, lanes = spatial
    # o_ref block: (1, TILE_R)    -- lane-dense output slab
    x = x_ref[...]
    if pool_type == "avg":
        r = jnp.sum(x, axis=-1, dtype=jnp.float32) * inv_hw
    elif pool_type == "max":
        r = jnp.max(x, axis=-1).astype(jnp.float32)
    elif pool_type == "avgmax":
        s = jnp.sum(x, axis=-1, dtype=jnp.float32) * inv_hw
        m = jnp.max(x, axis=-1).astype(jnp.float32)
        r = 0.5 * (s + m)
    else:
        raise ValueError(f"unsupported pool_type: {pool_type}")
    o_ref[0, :] = r.astype(o_ref.dtype)


def _hw_budget():
    """Return (per-input-block byte budget, VMEM capacity bytes) for this chip."""
    try:
        info = pltpu.get_tpu_info()
        vmem_cap = int(getattr(info, "vmem_capacity_bytes", 64 << 20))
    except Exception:
        vmem_cap = 64 << 20  # conservative: smallest per-core VMEM (v7x-class)
    # 64 MiB-VMEM / ~3.2 TB/s chips: ~12 MiB blocks cut per-step overhead to a
    # few %.  128 MiB-VMEM chips (v5e/v6e, 0.8-1.4 TB/s): 8 MiB is already
    # <10% overhead and comfortably inside scoped VMEM when double-buffered.
    block_bytes = (12 << 20) if vmem_cap <= (64 << 20) else (8 << 20)
    return block_bytes, vmem_cap


def _choose_tile_rows(num_rows: int, padded_row_bytes: int, block_bytes: int) -> int:
    """Row tile for the (R, HW) view.

    The (1, tile_r) output block needs tile_r % 128 == 0 (unmasked lane-dense
    stores) unless tile_r == num_rows (full dim).  Tiles are sized from the
    lane-PADDED row footprint so the double-buffered block really fits the
    budget, and the grid is kept >= 2 (and even where possible) for row counts
    large enough to split, so dual-core chips get balanced parallel work.
    """
    if num_rows <= 128:
        return num_rows
    rows_fit = (block_bytes // max(1, padded_row_bytes)) // 128 * 128
    rows_fit = max(128, rows_fit)
    if rows_fit >= num_rows:
        if num_rows < 256:
            return num_rows  # too small to split on 128-row-aligned tiles
        # Whole problem fits one block -> still split into 2 balanced steps.
        return min(rows_fit, _round_up(pl.cdiv(num_rows, 2), 128))
    grid = pl.cdiv(num_rows, rows_fit)
    if grid % 2:  # try to avoid a straggler step on dual-core chips
        balanced = _round_up(pl.cdiv(num_rows, grid + 1), 128)
        if balanced >= 128 and pl.cdiv(num_rows, balanced) % 2 == 0:
            return min(rows_fit, balanced)
    return rows_fit


def _reference(x, pool_type="avg", flatten=False):
    if pool_type == "avg":
        r = jnp.mean(x, axis=(2, 3), keepdims=True)
    elif pool_type == "max":
        r = jnp.max(x, axis=(2, 3), keepdims=True)
    else:  # avgmax
        r = 0.5 * (jnp.mean(x, axis=(2, 3), keepdims=True)
                   + jnp.max(x, axis=(2, 3), keepdims=True))
    if flatten:
        r = r.reshape(x.shape[0], x.shape[1])
    return r


def select_adaptive_pool2d(x, output_size=1, pool_type="avg", flatten=False,
                           block_bytes=None, min_pallas_bytes=1 << 20):
    """Pallas implementation of SelectAdaptivePool2d.forward for output_size=1."""
    assert output_size == 1, "only global (output_size=1) pooling implemented"
    if pool_type not in ("avg", "max", "avgmax"):
        raise ValueError(f"unsupported pool_type: {pool_type}")

    N, C, H, W = x.shape
    HW = H * W
    R = N * C
    itemsize = jnp.dtype(x.dtype).itemsize

    # Tiny heads: kernel-dispatch + single-step pipeline overhead dominates,
    # a fused XLA reduction is faster than any pallas_call.
    if R * HW * itemsize < min_pallas_bytes:
        return _reference(x, pool_type, flatten)

    hw_block_bytes, vmem_cap = _hw_budget()
    if block_bytes is None:
        block_bytes = hw_block_bytes

    # Free, contiguous reshape: (N, C, H, W) -> (N*C, H*W). Puts H*W on lanes.
    x2 = x.reshape(R, HW)

    # Size tiles from the lane-padded per-row VMEM footprint (the VMEM block's
    # minor dim is padded to a multiple of 128 lanes; HW=49/196 are common).
    padded_row_bytes = _round_up(HW, 128) * itemsize
    tile_r = _choose_tile_rows(R, padded_row_bytes, block_bytes)
    grid_r = pl.cdiv(R, tile_r)

    kernel = functools.partial(
        _global_pool_rows_kernel, pool_type=pool_type, inv_hw=1.0 / float(HW))

    # Scoped-VMEM need: double-buffered padded input block + double-buffered
    # (sublane-padded) output block + headroom.  Always set the limit (default
    # scoped budgets are only 16/32 MiB) but never ask past physical VMEM.
    need = (2 * tile_r * padded_row_bytes
            + 2 * 8 * _round_up(tile_r, 128) * itemsize
            + (2 << 20))
    vmem_limit = int(min(max(need, 32 << 20), int(vmem_cap * 0.9)))

    out = pl.pallas_call(
        kernel,
        out_shape=jax.ShapeDtypeStruct((1, R), x.dtype),
        grid_spec=pltpu.PrefetchScalarGridSpec(
            num_scalar_prefetch=0,
            grid=(grid_r,),
            in_specs=[pl.BlockSpec((tile_r, HW), lambda r: (r, 0))],
            out_specs=pl.BlockSpec((1, tile_r), lambda r: (0, r)),
        ),
        compiler_params=pltpu.CompilerParams(
            dimension_semantics=("parallel",),
            vmem_limit_bytes=vmem_limit,
        ),
    )(x2)

    if flatten:
        return out.reshape(N, C)
    return out.reshape(N, C, 1, 1)


if __name__ == "__main__":
    key = jax.random.PRNGKey(0)

    # Default module config: pool_type='avg', output_size=1, flatten=False.
    N, C, H, W = 2, 4, 16, 16
    x = jax.random.normal(key, (N, C, H, W), dtype=jnp.float32)

    # Force the Pallas path (min_pallas_bytes=0) for the small correctness tests.
    y = select_adaptive_pool2d(x, output_size=1, pool_type="avg", flatten=False,
                               min_pallas_bytes=0)
    jax.block_until_ready(y)
    assert y.shape == (N, C, 1, 1), y.shape
    assert jnp.allclose(y, _reference(x, "avg", False), atol=1e-5, rtol=1e-5), \
        "avg mismatch vs reference"

    # Other pool types + flatten path.
    for pt in ("max", "avgmax"):
        yp = select_adaptive_pool2d(x, pool_type=pt, flatten=True,
                                    min_pallas_bytes=0)
        jax.block_until_ready(yp)
        assert yp.shape == (N, C), yp.shape
        assert jnp.allclose(yp, _reference(x, pt, True), atol=1e-5, rtol=1e-5), \
            f"{pt} mismatch vs reference"

    # Tiny-head fallback path (default threshold -> fused XLA reduction).
    yf = select_adaptive_pool2d(x, pool_type="avg")
    jax.block_until_ready(yf)
    assert jnp.allclose(yf, _reference(x, "avg", False), atol=1e-5, rtol=1e-5), \
        "fallback avg mismatch vs reference"

    # Larger shape with a small block budget to exercise a multi-step, even,
    # parallel grid (R=512, HW=196 lane-padded, tile_r=128, grid=(4,)).
    x2 = jax.random.normal(jax.random.PRNGKey(1), (2, 256, 14, 14), jnp.float32)
    y2 = select_adaptive_pool2d(x2, block_bytes=64 * 1024, min_pallas_bytes=0)
    jax.block_until_ready(y2)
    assert jnp.allclose(y2, _reference(x2, "avg", False), atol=1e-5, rtol=1e-5), \
        "tiled avg mismatch vs reference"

    # Ragged row count (R=200 not a multiple of 128) -> masked last block.
    x3 = jax.random.normal(jax.random.PRNGKey(2), (2, 100, 7, 7), jnp.float32)
    y3 = select_adaptive_pool2d(x3, pool_type="avgmax", block_bytes=64 * 1024,
                                min_pallas_bytes=0)
    jax.block_until_ready(y3)
    assert y3.shape == (2, 100, 1, 1), y3.shape
    assert jnp.allclose(y3, _reference(x3, "avgmax", False), atol=1e-5, rtol=1e-5), \
        "ragged avgmax mismatch vs reference"

    # bf16 input (output dtype follows input, f32 accumulation inside).
    x4 = jax.random.normal(jax.random.PRNGKey(3), (2, 64, 14, 14),
                           jnp.float32).astype(jnp.bfloat16)
    y4 = select_adaptive_pool2d(x4, pool_type="avg", min_pallas_bytes=0)
    jax.block_until_ready(y4)
    ref4 = _reference(x4.astype(jnp.float32), "avg", False).astype(jnp.bfloat16)
    assert jnp.allclose(y4.astype(jnp.float32), ref4.astype(jnp.float32),
                        atol=2e-2, rtol=2e-2), "bf16 avg mismatch vs reference"

    print("KERNEL_OK")
</pallas_src>

<mosaic_0001>
module attributes {stable_mosaic.version = 11 : i64} {
  func.func @_global_pool_rows_kernel(%arg0: i32, %arg1: memref<8x256xf32, #tpu.memory_space<vmem>>, %arg2: memref<1x8xf32, #tpu.memory_space<vmem>>) attributes {dimension_semantics = [#tpu.dimension_semantics<parallel>], iteration_bounds = array<i64: 1>, scalar_prefetch = 0 : i64, scratch_operands = 0 : i64, tpu.core_type = #tpu.core_type<tc>, window_params = [{transform_indices = @transform_0, window_bounds = array<i64: 8, 256>}, {transform_indices = @transform_1, window_bounds = array<i64: 1, 8>}]} {
    %c0 = arith.constant 0 : index
    %c0_0 = arith.constant 0 : index
    %0 = vector.load %arg1[%c0, %c0_0] : memref<8x256xf32, #tpu.memory_space<vmem>>, vector<8x256xf32>
    %cst = arith.constant dense<0.000000e+00> : vector<8xf32>
    %1 = vector.multi_reduction <add>, %0, %cst [1] : vector<8x256xf32> to vector<8xf32>
    %cst_1 = arith.constant 3.906250e-03 : f32
    %2 = vector.broadcast %cst_1 : f32 to vector<8xf32>
    %3 = arith.mulf %1, %2 : vector<8xf32>
    %c0_2 = arith.constant 0 : index
    %c0_3 = arith.constant 0 : index
    %4 = vector.load %arg2[%c0_2, %c0_3] : memref<1x8xf32, #tpu.memory_space<vmem>>, vector<1x8xf32>
    %5 = vector.shape_cast %4 : vector<1x8xf32> to vector<8xf32>
    %6 = vector.shape_cast %3 : vector<8xf32> to vector<1x8xf32>
    tpu.vector_store %arg2[%c0_2, %c0_3], %6 {strides = array<i32>} : memref<1x8xf32, #tpu.memory_space<vmem>>, vector<1x8xf32>,
    return
  }
  func.func @transform_0(%arg0: i32) -> (i32, i32) {
    %c0_i32 = arith.constant 0 : i32
    %c0_i32_0 = arith.constant 0 : i32
    return %arg0, %c0_i32 : i32, i32
  }
  func.func @transform_1(%arg0: i32) -> (i32, i32) {
    %c0_i32 = arith.constant 0 : i32
    %c0_i32_0 = arith.constant 0 : i32
    return %c0_i32, %arg0 : i32, i32
  }
}

</mosaic_0001>

<llo_original>
// kernel: tpu_custom_call.1
$region0: #{tpu_custom_call.1}
  #allocation0 [shape = 'u32[]', space=smem, size = 0x4, offset = 0x4, fixed_abs, tag = 'smem constant byte address 0x4 - core index']
  #allocation1 [shape = 'u32[144,128]{1,0:T(1,128)}', space=vmem, size = 0x12000, scoped, tag = 'internal scratch']
  %s0 = inlined_call_operand.hbm [shape: f32[8,256], index: 0, kind: input, shape index: {}]
  %s1 = inlined_call_operand.hbm [shape: f32[1,8], index: 1, kind: output, shape index: {}]
  %s2 = sld [smem:[#allocation0]]
  $region18: #{tpu_custom_call.1} parent=0
    _
  %s4 = ssub.s32 1, %s2
  %s5 = scalar_select 0, %s4, %s2
  $region1: #{tpu_custom_call.1} parent=0
    #allocation2 [shape = 'u8[8192]{0}', space=vmem, size = 0x2000, scoped, tag = 'input window, operand 0, single buffered']
    #allocation3 [shape = 's32[1]{0}', space=sflag, size = 0x4, scoped, tag = 'scoped memory for tpu_custom_call.1']
    #allocation4 [shape = 's32[1]{0}', space=sflag, size = 0x4, scoped, tag = 'scoped memory for tpu_custom_call.1']
    #allocation5 [shape = 'u8[512]{0}', space=vmem, size = 0x400, scoped, tag = 'output window, operand 0, single buffered']
    %6 = vsyncpa [#allocation3], 0
    %7 = vsyncpa [#allocation4], 0
    // Predicated region
    $region2: #{tpu_custom_call.1} parent=1 // pred_check
      _
    $region3: #{tpu_custom_call.1} parent=1 // pred_check_branch
      %9 = sbr.rel (0) target = $region5
    $region4: #{tpu_custom_call.1} parent=1 // pred_region
      %s11 = ssub.s32 256, 256
      %12 = vsyncadd [#allocation3], %s11
      %s14 = sshll.u32 [#allocation2], 4
      %s15 = int_to_ptr.vmem [resolvable:$true] %s14
      %17 = dma.hbm_to_vmem [thread:$0]  %s0, 256, %s15, [#allocation3]
    $region5: #{tpu_custom_call.1} parent=1 // pred_fallthru
      _
    // Predicated region
    $region6: #{tpu_custom_call.1} parent=1 // pred_check
      _
    $region7: #{tpu_custom_call.1} parent=1 // pred_check_branch
      %19 = sbr.rel (0) target = $region9
    $region8: #{tpu_custom_call.1} parent=1 // pred_region
      %20 = dma.done [#allocation3], 256
    $region9: #{tpu_custom_call.1} parent=1 // pred_fallthru
      _
    %v21 = vld [vmem:[#allocation2] sm:$0xff]
    %v22 = vld [vmem:[#allocation2 + $0x8] sm:$0xff]
    %v23 = vadd.f32 %v21, %v22
    %24 = vadd.xlane.f32.xlu0 %v23
    %v25 = vpop.xlane.xlu0 %24
    %v26 = vmul.f32 %v25, 0.00390625
    %v28 = vlaneseq
    %v29 = vand.u32 %v28, 127
    %v30 = vlaneseq
    %v31 = vshrl.u32 %v30, 7
    %v32 = vsub.s32 %v29, %v31
    %v33 = vrot.slane %v26, %v32
    %vm35 = vcmask 57344
    %36 = vst.msk [vmem:[#allocation5] sm:$0x1] %vm35, %v33
    // Predicated region
    $region10: #{tpu_custom_call.1} parent=1 // pred_check
      _
    $region11: #{tpu_custom_call.1} parent=1 // pred_check_branch
      %38 = sbr.rel (0) target = $region13
    $region12: #{tpu_custom_call.1} parent=1 // pred_region
      %s40 = ssub.s32 16, 16
      %41 = vsyncadd [#allocation4], %s40
      %s43 = sshll.u32 [#allocation5], 4
      %s44 = int_to_ptr.vmem [resolvable:$true] %s43
      %46 = dma.vmem_to_hbm [thread:$0]  %s44, 16, %s1, [#allocation4]
    $region13: #{tpu_custom_call.1} parent=1 // pred_fallthru
      _
    // Predicated region
    $region14: #{tpu_custom_call.1} parent=1 // pred_check
      _
    $region15: #{tpu_custom_call.1} parent=1 // pred_check_branch
      %48 = sbr.rel (0) target = $region17
    $region16: #{tpu_custom_call.1} parent=1 // pred_region
      %49 = dma.done [#allocation4], 16
    $region17: #{tpu_custom_call.1} parent=1 // pred_fallthru
      _
    %50 = vsyncpa [#allocation3], 1
    %51 = vsyncpa [#allocation4], 1

</llo_original>
